<compile_context>
chip_gen: v5e
topology: v5e:2x2
jax: 0.10.0
libtpu: 0.0.40
codegen_flags: <defaults>
</compile_context>

<pallas_src>
import jax
import jax.numpy as jnp
import numpy as np
from jax.experimental import pallas as pl
from jax.experimental.pallas import tpu as pltpu


def _normalize_kernel(scale_ref, bias_ref, x_ref, o_ref):
    # scale_ref / bias_ref: f32 VMEM blocks broadcastable against the x block.
    # x_ref / o_ref: VMEM blocks of identical shape (dtypes may differ).
    x = x_ref[...]
    if not jnp.issubdtype(x.dtype, jnp.floating):
        x = x.astype(jnp.int32)  # widen packed uint8/int8 before the f32 convert
    o_ref[...] = (x.astype(jnp.float32) * scale_ref[...]
                  + bias_ref[...]).astype(o_ref.dtype)


def _sublane_multiple(dtype):
    # Native sublane tile height per dtype width (packed dtypes pack sublanes).
    return {4: 8, 2: 16, 1: 32}[jnp.dtype(dtype).itemsize]


def _pick_lane(hw):
    """Largest multiple of 128 (<= 2048) dividing H*W, or None."""
    for cand in (2048, 1024, 512, 256, 128):
        if hw % cand == 0:
            return cand
    return None


def _round_down(x, m):
    return (x // m) * m


def normalize_conv(x, scale, bias, *, out_dtype=None,
                   target_block_bytes=16 * 1024 * 1024):
    """Per-channel affine: out[n,c,h,w] = x[n,c,h,w] * scale[c] + bias[c].

    Equivalent to NormalizeConv's frozen 1x1 depthwise conv (compute in f32).

    x:      (N, C, H, W)  float32 / bfloat16 / uint8 / int8
    scale:  (C,)          == 1/std
    bias:   (C,)          == -mean/std
    out_dtype: defaults to x.dtype for float inputs, bfloat16 for int inputs.
    target_block_bytes: budget for (input + output) HBM traffic per grid step;
        the scoped-VMEM limit is derived from the resulting block footprint.
    """
    N, C, H, W = x.shape
    assert scale.shape == (C,) and bias.shape == (C,)

    if out_dtype is None:
        out_dtype = x.dtype if jnp.issubdtype(x.dtype, jnp.floating) else jnp.bfloat16
    out_dtype = jnp.dtype(out_dtype)

    in_b = jnp.dtype(x.dtype).itemsize
    out_b = out_dtype.itemsize
    elem_bytes = in_b + out_b  # HBM bytes moved per element per step
    sub = max(_sublane_multiple(x.dtype), _sublane_multiple(out_dtype))

    HW = H * W
    lane = _pick_lane(HW)
    if lane is not None:
        # Lane-dense path: view each plane as (M, lane), lane % 128 == 0.
        rows, last = HW // lane, lane
        x_v = x.reshape(N, C, rows, last)
    else:
        # Fallback (H*W not a multiple of 128): keep (H, W); W is the full last
        # dim so the block is still legal, and rows (H) can be tiled below.
        rows, last = H, W
        x_v = x

    view_shape = (N, C, rows, last)
    plane_bytes = HW * elem_bytes

    # Tiny f32 scale/bias rows (1, C, 1, last): one kernel body handles both the
    # per-channel-block and folded-C layouts via in-kernel broadcast.
    scale_v = jnp.broadcast_to(scale.astype(jnp.float32).reshape(1, C, 1, 1),
                               (1, C, 1, last))
    bias_v = jnp.broadcast_to(bias.astype(jnp.float32).reshape(1, C, 1, 1),
                              (1, C, 1, last))

    if C * plane_bytes <= target_block_bytes:
        # Small planes: fold C into the block and pack several images per step.
        tile_n = max(1, min(N, int(target_block_bytes // (C * plane_bytes))))
        grid = (pl.cdiv(N, tile_n),)
        x_block = (tile_n, C, rows, last)
        x_map = lambda n: (n, 0, 0, 0)
        sb_block = (1, C, 1, last)
        sb_map = lambda n: (0, 0, 0, 0)
        semantics = ("parallel",)
    elif plane_bytes <= target_block_bytes:
        # One (n, c) plane per step.
        grid = (N, C)
        x_block = (1, 1, rows, last)
        x_map = lambda n, c: (n, c, 0, 0)
        sb_block = (1, 1, 1, last)
        sb_map = lambda n, c: (0, c, 0, 0)
        semantics = ("parallel", "parallel")
    else:
        # Large planes: tile rows; row tile is a multiple of the packed-dtype
        # sublane tile (or the full dim), tail blocks are masked by Pallas.
        max_rows_fit = max(1, int(target_block_bytes // (last * elem_bytes)))
        if rows <= sub or max_rows_fit >= rows:
            tile_r = rows
        else:
            tile_r = max(sub, _round_down(min(max_rows_fit, rows), sub))
        grid = (N, C, pl.cdiv(rows, tile_r))
        x_block = (1, 1, tile_r, last)
        x_map = lambda n, c, r: (n, c, r, 0)
        sb_block = (1, 1, 1, last)
        sb_map = lambda n, c, r: (0, c, 0, 0)
        semantics = ("parallel", "parallel", "parallel")

    # Scoped-VMEM limit derived from the double-buffered in/out block footprint
    # (+ scale/bias + margin for compiler-internal scratch).  Default target
    # gives ~37 MiB: safe on v7x's 64 MiB per-TC VMEM, and explicitly above
    # v5e's 16 MiB default scoped limit.
    block_elems = int(np.prod(x_block))
    io_block_bytes = block_elems * elem_bytes
    sb_bytes = 2 * C * last * 4
    vmem_limit = int(2 * io_block_bytes + 4 * sb_bytes + 4 * 1024 * 1024)
    vmem_limit = max(vmem_limit, 16 * 1024 * 1024)

    out = pl.pallas_call(
        _normalize_kernel,
        out_shape=jax.ShapeDtypeStruct(view_shape, out_dtype),
        grid_spec=pltpu.PrefetchScalarGridSpec(
            num_scalar_prefetch=0,
            grid=grid,
            in_specs=[
                pl.BlockSpec(sb_block, sb_map),   # scale (1, C, 1, last) f32
                pl.BlockSpec(sb_block, sb_map),   # bias  (1, C, 1, last) f32
                pl.BlockSpec(x_block, x_map),
            ],
            out_specs=pl.BlockSpec(x_block, x_map),
        ),
        compiler_params=pltpu.CompilerParams(
            dimension_semantics=semantics,
            vmem_limit_bytes=vmem_limit,
        ),
    )(scale_v, bias_v, x_v)
    return out.reshape(N, C, H, W)


def make_normalize_params(in_channel,
                          normal_mean=(103.53, 116.28, 123.675),
                          normal_std=(57.375, 57.12, 58.395),
                          gray_mode=False,
                          bgr_mode=True):
    """Deterministic parameter construction mirroring NormalizeConv.__init__."""
    normal_mean = list(normal_mean)
    normal_std = list(normal_std)
    if gray_mode:
        if bgr_mode:
            normal_mean = [(normal_mean[2] * 299 + normal_mean[1] * 587
                            + normal_mean[0] * 114 + 500) / 1000]
        else:
            normal_mean = [(normal_mean[0] * 299 + normal_mean[1] * 587
                            + normal_mean[2] * 114 + 500) / 1000]
    bias = np.array([-m / s for m, s in zip(normal_mean, normal_std)],
                    dtype=np.float32)
    scale = np.array([1.0 / s for s in normal_std], dtype=np.float32)
    assert scale.shape[0] == in_channel, "in_channel must match mean/std length"
    return jnp.asarray(scale), jnp.asarray(bias)


def _ref(x, scale, bias):
    return (x.astype(jnp.float32) * scale[None, :, None, None]
            + bias[None, :, None, None])


if __name__ == "__main__":
    key = jax.random.PRNGKey(0)
    N, C, H, W = 2, 3, 16, 16  # in_channel=3 matches the default BGR mean/std
    scale, bias = make_normalize_params(C)
    k1, k2, k3 = jax.random.split(key, 3)

    # (a) f32 -> f32: exact semantics of the original module's forward.
    x32 = jax.random.uniform(k1, (N, C, H, W), dtype=jnp.float32) * 255.0
    out32 = jax.block_until_ready(normalize_conv(x32, scale, bias))
    ref32 = _ref(x32, scale, bias)
    assert out32.dtype == jnp.float32
    np.testing.assert_allclose(np.asarray(out32), np.asarray(ref32),
                               rtol=1e-6, atol=1e-5)

    # (b) uint8 -> bf16: dtype-reduced fast path (3 B/elem instead of 8).
    xu8 = jax.random.randint(k2, (N, C, H, W), 0, 256,
                             dtype=jnp.int32).astype(jnp.uint8)
    outu8 = jax.block_until_ready(normalize_conv(xu8, scale, bias))
    assert outu8.dtype == jnp.bfloat16
    refu8 = _ref(xu8, scale, bias)
    np.testing.assert_allclose(np.asarray(outu8, dtype=np.float32),
                               np.asarray(refu8), rtol=2e-2, atol=2e-2)

    # (c) lane-sparse fallback: H*W not a multiple of 128 (keeps (H, W) layout).
    xod = jax.random.uniform(k3, (N, C, 10, 12), dtype=jnp.float32) * 255.0
    outod = jax.block_until_ready(normalize_conv(xod, scale, bias))
    np.testing.assert_allclose(np.asarray(outod), np.asarray(_ref(xod, scale, bias)),
                               rtol=1e-6, atol=1e-5)

    # (d) force the per-plane and row-tiled grid branches with tiny block targets.
    outp = jax.block_until_ready(
        normalize_conv(x32, scale, bias, target_block_bytes=2048))
    np.testing.assert_allclose(np.asarray(outp), np.asarray(ref32),
                               rtol=1e-6, atol=1e-5)

    xrt = jax.random.uniform(k1, (1, C, 48, 48), dtype=jnp.float32) * 255.0
    outrt = jax.block_until_ready(
        normalize_conv(xrt, scale, bias, target_block_bytes=4096))
    np.testing.assert_allclose(np.asarray(outrt), np.asarray(_ref(xrt, scale, bias)),
                               rtol=1e-6, atol=1e-5)

    print("KERNEL_OK")
</pallas_src>

<mosaic_0001>
module attributes {stable_mosaic.version = 11 : i64} {
  func.func @_normalize_kernel(%arg0: i32, %arg1: memref<1x3x1x256xf32, #tpu.memory_space<vmem>>, %arg2: memref<1x3x1x256xf32, #tpu.memory_space<vmem>>, %arg3: memref<2x3x1x256xf32, #tpu.memory_space<vmem>>, %arg4: memref<2x3x1x256xf32, #tpu.memory_space<vmem>>) attributes {dimension_semantics = [#tpu.dimension_semantics<parallel>], iteration_bounds = array<i64: 1>, scalar_prefetch = 0 : i64, scratch_operands = 0 : i64, tpu.core_type = #tpu.core_type<tc>, window_params = [{pipeline_mode = #tpu.pipeline_mode<synchronous>, transform_indices = @transform_0, window_bounds = array<i64: 1, 3, 1, 256>}, {pipeline_mode = #tpu.pipeline_mode<synchronous>, transform_indices = @transform_1, window_bounds = array<i64: 1, 3, 1, 256>}, {transform_indices = @transform_2, window_bounds = array<i64: 2, 3, 1, 256>}, {transform_indices = @transform_3, window_bounds = array<i64: 2, 3, 1, 256>}]} {
    %c0 = arith.constant 0 : index
    %c0_0 = arith.constant 0 : index
    %c0_1 = arith.constant 0 : index
    %c0_2 = arith.constant 0 : index
    %0 = vector.load %arg3[%c0, %c0_0, %c0_1, %c0_2] : memref<2x3x1x256xf32, #tpu.memory_space<vmem>>, vector<2x3x1x256xf32>
    %c0_3 = arith.constant 0 : index
    %c0_4 = arith.constant 0 : index
    %c0_5 = arith.constant 0 : index
    %c0_6 = arith.constant 0 : index
    %1 = vector.load %arg1[%c0_3, %c0_4, %c0_5, %c0_6] : memref<1x3x1x256xf32, #tpu.memory_space<vmem>>, vector<1x3x1x256xf32>
    %2 = vector.broadcast %1 : vector<1x3x1x256xf32> to vector<2x3x1x256xf32>
    %3 = arith.mulf %0, %2 : vector<2x3x1x256xf32>
    %c0_7 = arith.constant 0 : index
    %c0_8 = arith.constant 0 : index
    %c0_9 = arith.constant 0 : index
    %c0_10 = arith.constant 0 : index
    %4 = vector.load %arg2[%c0_7, %c0_8, %c0_9, %c0_10] : memref<1x3x1x256xf32, #tpu.memory_space<vmem>>, vector<1x3x1x256xf32>
    %5 = vector.broadcast %4 : vector<1x3x1x256xf32> to vector<2x3x1x256xf32>
    %6 = arith.addf %3, %5 : vector<2x3x1x256xf32>
    %c0_11 = arith.constant 0 : index
    %c0_12 = arith.constant 0 : index
    %c0_13 = arith.constant 0 : index
    %c0_14 = arith.constant 0 : index
    %7 = vector.load %arg4[%c0_11, %c0_12, %c0_13, %c0_14] : memref<2x3x1x256xf32, #tpu.memory_space<vmem>>, vector<2x3x1x256xf32>
    tpu.vector_store %arg4[%c0_11, %c0_12, %c0_13, %c0_14], %6 {strides = array<i32>} : memref<2x3x1x256xf32, #tpu.memory_space<vmem>>, vector<2x3x1x256xf32>,
    return
  }
  func.func @transform_0(%arg0: i32) -> (i32, i32, i32, i32) {
    %c0_i32 = arith.constant 0 : i32
    %c0_i32_0 = arith.constant 0 : i32
    %c0_i32_1 = arith.constant 0 : i32
    %c0_i32_2 = arith.constant 0 : i32
    %c0_i32_3 = arith.constant 0 : i32
    return %c0_i32, %c0_i32_0, %c0_i32_1, %c0_i32_2 : i32, i32, i32, i32
  }
  func.func @transform_1(%arg0: i32) -> (i32, i32, i32, i32) {
    %c0_i32 = arith.constant 0 : i32
    %c0_i32_0 = arith.constant 0 : i32
    %c0_i32_1 = arith.constant 0 : i32
    %c0_i32_2 = arith.constant 0 : i32
    %c0_i32_3 = arith.constant 0 : i32
    return %c0_i32, %c0_i32_0, %c0_i32_1, %c0_i32_2 : i32, i32, i32, i32
  }
  func.func @transform_2(%arg0: i32) -> (i32, i32, i32, i32) {
    %c0_i32 = arith.constant 0 : i32
    %c0_i32_0 = arith.constant 0 : i32
    %c0_i32_1 = arith.constant 0 : i32
    %c0_i32_2 = arith.constant 0 : i32
    return %arg0, %c0_i32, %c0_i32_0, %c0_i32_1 : i32, i32, i32, i32
  }
  func.func @transform_3(%arg0: i32) -> (i32, i32, i32, i32) {
    %c0_i32 = arith.constant 0 : i32
    %c0_i32_0 = arith.constant 0 : i32
    %c0_i32_1 = arith.constant 0 : i32
    %c0_i32_2 = arith.constant 0 : i32
    return %arg0, %c0_i32, %c0_i32_0, %c0_i32_1 : i32, i32, i32, i32
  }
}

</mosaic_0001>

<llo_original>
// kernel: tpu_custom_call.1
$region0: #{tpu_custom_call.1}
  #allocation0 [shape = 'u32[]', space=smem, size = 0x4, offset = 0x4, fixed_abs, tag = 'smem constant byte address 0x4 - core index']
  #allocation1 [shape = 'u32[72,128]{1,0:T(1,128)}', space=vmem, size = 0x9000, scoped, tag = 'internal scratch']
  %s0 = inlined_call_operand.hbm [shape: f32[1,3,1,256], index: 0, kind: input, shape index: {}]
  %s1 = inlined_call_operand.hbm [shape: f32[1,3,1,256], index: 1, kind: input, shape index: {}]
  %s2 = inlined_call_operand.hbm [shape: f32[2,3,1,256], index: 2, kind: input, shape index: {}]
  %s3 = inlined_call_operand.hbm [shape: f32[2,3,1,256], index: 3, kind: output, shape index: {}]
  %s4 = sld [smem:[#allocation0]]
  $region34: #{tpu_custom_call.1} parent=0
    _
  %s6 = ssub.s32 1, %s4
  %s7 = scalar_select 0, %s6, %s4
  $region1: #{tpu_custom_call.1} parent=0
    #allocation2 [shape = 'u8[3072]{0}', space=vmem, size = 0xc00, scoped, tag = 'input window, operand 0, single buffered']
    #allocation3 [shape = 's32[1]{0}', space=sflag, size = 0x4, scoped, tag = 'scoped memory for tpu_custom_call.1']
    #allocation4 [shape = 's32[1]{0}', space=sflag, size = 0x4, scoped, tag = 'scoped memory for tpu_custom_call.1']
    #allocation5 [shape = 'u8[3072]{0}', space=vmem, size = 0xc00, scoped, tag = 'input window, operand 1, single buffered']
    #allocation6 [shape = 's32[1]{0}', space=sflag, size = 0x4, scoped, tag = 'scoped memory for tpu_custom_call.1']
    #allocation7 [shape = 'u8[6144]{0}', space=vmem, size = 0x1800, scoped, tag = 'input window, operand 2, single buffered']
    #allocation8 [shape = 'u8[6144]{0}', space=vmem, size = 0x1800, scoped, tag = 'output window, operand 0, single buffered']
    %8 = vsyncpa [#allocation3], 0
    %9 = vsyncpa [#allocation6], 0
    %10 = vsyncpa [#allocation4], 0
    // Predicated region
    $region2: #{tpu_custom_call.1} parent=1 // pred_check
      _
    $region3: #{tpu_custom_call.1} parent=1 // pred_check_branch
      %12 = sbr.rel (0) target = $region5
    $region4: #{tpu_custom_call.1} parent=1 // pred_region
      %14 = vsyncadd [#allocation3], 0
      %s15 = sshll.u32 %s0, 4
      %s16 = int_to_ptr.hbm [resolvable:$true] %s15
      %s17 = sshll.u32 [#allocation2], 4
      %s18 = int_to_ptr.vmem [resolvable:$true] %s17
      %23 = dma.hbm_to_vmem [thread:$0]  %s16, 96, %s18, [#allocation3], 32, 32, 2
    $region5: #{tpu_custom_call.1} parent=1 // pred_fallthru
      _
    // Predicated region
    $region6: #{tpu_custom_call.1} parent=1 // pred_check
      _
    $region7: #{tpu_custom_call.1} parent=1 // pred_check_branch
      %25 = sbr.rel (0) target = $region9
    $region8: #{tpu_custom_call.1} parent=1 // pred_region
      %27 = vsyncadd [#allocation6], 0
      %s28 = sshll.u32 %s1, 4
      %s29 = int_to_ptr.hbm [resolvable:$true] %s28
      %s30 = sshll.u32 [#allocation5], 4
      %s31 = int_to_ptr.vmem [resolvable:$true] %s30
      %36 = dma.hbm_to_vmem [thread:$0]  %s29, 96, %s31, [#allocation6], 32, 32, 2
    $region9: #{tpu_custom_call.1} parent=1 // pred_fallthru
      _
    // Predicated region
    $region10: #{tpu_custom_call.1} parent=1 // pred_check
      _
    $region11: #{tpu_custom_call.1} parent=1 // pred_check_branch
      %38 = sbr.rel (0) target = $region13
    $region12: #{tpu_custom_call.1} parent=1 // pred_region
      %40 = vsyncadd [#allocation6], 0
      %s41 = sshll.u32 %s2, 4
      %s42 = int_to_ptr.hbm [resolvable:$true] %s41
      %s43 = sshll.u32 [#allocation7], 4
      %s44 = int_to_ptr.vmem [resolvable:$true] %s43
      %49 = dma.hbm_to_vmem [thread:$0]  %s42, 192, %s44, [#allocation6], 32, 32, 2
    $region13: #{tpu_custom_call.1} parent=1 // pred_fallthru
      _
    // Predicated region
    $region14: #{tpu_custom_call.1} parent=1 // pred_check
      _
    $region15: #{tpu_custom_call.1} parent=1 // pred_check_branch
      %51 = sbr.rel (0) target = $region17
    $region16: #{tpu_custom_call.1} parent=1 // pred_region
      %53 = dma.done [#allocation3], 96
    $region17: #{tpu_custom_call.1} parent=1 // pred_fallthru
      _
    // Predicated region
    $region18: #{tpu_custom_call.1} parent=1 // pred_check
      _
    $region19: #{tpu_custom_call.1} parent=1 // pred_check_branch
      %55 = sbr.rel (0) target = $region21
    $region20: #{tpu_custom_call.1} parent=1 // pred_region
      %57 = dma.done [#allocation6], 96
    $region21: #{tpu_custom_call.1} parent=1 // pred_fallthru
      _
    // Predicated region
    $region22: #{tpu_custom_call.1} parent=1 // pred_check
      _
    $region23: #{tpu_custom_call.1} parent=1 // pred_check_branch
      %59 = sbr.rel (0) target = $region25
    $region24: #{tpu_custom_call.1} parent=1 // pred_region
      %61 = dma.done [#allocation6], 192
    $region25: #{tpu_custom_call.1} parent=1 // pred_fallthru
      _
    %v62 = vld [vmem:[#allocation7] sm:$0x3]
    %v63 = vld [vmem:[#allocation7 + $0x2] sm:$0x3]
    %v64 = vld [vmem:[#allocation7 + $0x4] sm:$0x3]
    %v65 = vld [vmem:[#allocation7 + $0x6] sm:$0x3]
    %v66 = vld [vmem:[#allocation7 + $0x8] sm:$0x3]
    %v67 = vld [vmem:[#allocation7 + $0xa] sm:$0x3]
    %v68 = vld [vmem:[#allocation2] sm:$0x3]
    %v69 = vld [vmem:[#allocation2 + $0x2] sm:$0x3]
    %v70 = vld [vmem:[#allocation2 + $0x4] sm:$0x3]
    %v71 = vmul.f32 %v62, %v68
    %v72 = vmul.f32 %v63, %v69
    %v73 = vmul.f32 %v64, %v70
    %v74 = vmul.f32 %v65, %v68
    %v75 = vmul.f32 %v66, %v69
    %v76 = vmul.f32 %v67, %v70
    %v77 = vld [vmem:[#allocation5] sm:$0x3]
    %v78 = vld [vmem:[#allocation5 + $0x2] sm:$0x3]
    %v79 = vld [vmem:[#allocation5 + $0x4] sm:$0x3]
    %v80 = vadd.f32 %v71, %v77
    %v81 = vadd.f32 %v72, %v78
    %v82 = vadd.f32 %v73, %v79
    %v83 = vadd.f32 %v74, %v77
    %v84 = vadd.f32 %v75, %v78
    %v85 = vadd.f32 %v76, %v79
    %v86 = vlaneseq
    %vm87 = vcmp.ge.s32.totalorder %v86, 0
    %vm88 = vcmp.lt.s32.totalorder %v86, 256
    %vm89 = vmand %vm87, %vm88
    %90 = vst.msk [vmem:[#allocation8] sm:$0x3] %vm89, %v80
    %91 = vst.msk [vmem:[#allocation8 + $0x2] sm:$0x3] %vm89, %v81
    %92 = vst.msk [vmem:[#allocation8 + $0x4] sm:$0x3] %vm89, %v82
    %93 = vst.msk [vmem:[#allocation8 + $0x6] sm:$0x3] %vm89, %v83
    %94 = vst.msk [vmem:[#allocation8 + $0x8] sm:$0x3] %vm89, %v84
    %95 = vst.msk [vmem:[#allocation8 + $0xa] sm:$0x3] %vm89, %v85
    // Predicated region
    $region26: #{tpu_custom_call.1} parent=1 // pred_check
      _
    $region27: #{tpu_custom_call.1} parent=1 // pred_check_branch
      %97 = sbr.rel (0) target = $region29
    $region28: #{tpu_custom_call.1} parent=1 // pred_region
      %99 = vsyncadd [#allocation4], 0
      %s100 = sshll.u32 [#allocation8], 4
      %s101 = int_to_ptr.vmem [resolvable:$true] %s100
      %s102 = sshll.u32 %s3, 4
      %s103 = int_to_ptr.hbm [resolvable:$true] %s102
      %108 = dma.vmem_to_hbm [thread:$0]  %s101, 192, %s103, [#allocation4], 32, 32, 2
    $region29: #{tpu_custom_call.1} parent=1 // pred_fallthru
      _
    // Predicated region
    $region30: #{tpu_custom_call.1} parent=1 // pred_check
      _
    $region31: #{tpu_custom_call.1} parent=1 // pred_check_branch
      %110 = sbr.rel (0) target = $region33
    $region32: #{tpu_custom_call.1} parent=1 // pred_region
      %112 = dma.done [#allocation4], 192
    $region33: #{tpu_custom_call.1} parent=1 // pred_fallthru
      _
    %113 = vsyncpa [#allocation3], 1
    %114 = vsyncpa [#allocation6], 1
    %115 = vsyncpa [#allocation4], 1

</llo_original>
